<compile_context>
chip_gen: v7x
topology: tpu7x:2x2x1
jax: 0.10.0
libtpu: 0.0.40
codegen_flags: <defaults>
</compile_context>

<pallas_src>
import jax
import jax.numpy as jnp
from jax.experimental import pallas as pl
from jax.experimental.pallas import tpu as pltpu


def _round_up(n: int, m: int) -> int:
    return ((n + m - 1) // m) * m


def fused_affine_kernel(x_ref, w_ref, b_ref, o_ref):
    """o[0, :] = sum_k w[k, 0] * x[k, :] + b   (VPU multiply + small sublane reduce).

    x_ref: (K, TB) batch-on-lanes tile (native dtype, cast in-kernel).
    w_ref: (K, 1)  fused weight column, resident in VMEM (constant index_map).
    b_ref: (1, 1)  fused bias scalar in SMEM.
    o_ref: (1, TB) lane-dense output tile.
    """
    x = x_ref[...].astype(jnp.float32)                           # (K, TB)
    w = w_ref[...]                                               # (K, 1) -> broadcast over lanes
    acc = jnp.sum(x * w, axis=0, keepdims=True) + b_ref[0, 0]    # (1, TB) f32
    o_ref[...] = acc.astype(o_ref.dtype)


def simple_model_forward(x, w1, b1, w2, b2, *, tb=131072):
    """Forward of SimpleModel.

    x: (B, 10); w1: (5, 10); b1: (5,); w2: (1, 5); b2: (1,)  (nn.Linear layout).
    Returns (B, 1) in x.dtype (PyTorch-style: output dtype follows the input).
    """
    B, K = x.shape
    assert w1.shape == (w1.shape[0], K) and w2.shape[1] == w1.shape[0]

    # ---- plain-JAX glue: fuse the two linears into one affine map ----
    w_col = (w2 @ w1).astype(jnp.float32).reshape(K, 1)            # (K, 1)
    b_fused = (w2 @ b1 + b2).astype(jnp.float32).reshape(1, 1)     # (1, 1)

    # ---- batch on the lane axis: 128-aligned tiles, pad the ragged tail ----
    # TODO(synk): emit x as (features, batch) upstream so this transpose/pad pass
    # over x disappears from the end-to-end HBM traffic.
    tb = max(128, _round_up(tb, 128))
    tb = min(tb, _round_up(B, 128))
    b_pad = _round_up(B, tb)
    xt = x.T                                                       # (K, B), native dtype
    if b_pad != B:
        xt = jnp.pad(xt, ((0, 0), (0, b_pad - B)))

    grid = (b_pad // tb,)
    cost = pl.CostEstimate(
        flops=2 * b_pad * K,
        transcendentals=0,
        bytes_accessed=b_pad * K * x.dtype.itemsize + b_pad * 4 + (K + 1) * 4,
    )

    out = pl.pallas_call(
        fused_affine_kernel,
        out_shape=jax.ShapeDtypeStruct((1, b_pad), jnp.float32),
        grid_spec=pltpu.PrefetchScalarGridSpec(
            num_scalar_prefetch=0,
            grid=grid,
            in_specs=[
                # Pipelined (K, TB) batch tile -- lane axis carries the batch.
                pl.BlockSpec((K, tb), lambda i: (0, i)),
                # Fused weight column: constant index_map -> DMA'd once, resident.
                pl.BlockSpec((K, 1), lambda i: (0, 0)),
                # Fused bias as an SMEM scalar (no lane-padded VMEM tile).
                pl.BlockSpec((1, 1), lambda i: (0, 0),
                             memory_space=pltpu.MemorySpace.SMEM),
            ],
            # Lane-dense output block: full unmasked vst, no width-1 masked stores.
            out_specs=pl.BlockSpec((1, tb), lambda i: (0, i)),
        ),
        compiler_params=pltpu.CompilerParams(
            dimension_semantics=("parallel",),
        ),
        cost_estimate=cost,
    )(xt, w_col, b_fused)

    return out[0, :B].reshape(B, 1).astype(x.dtype)


if __name__ == "__main__":
    key = jax.random.PRNGKey(0)
    k_x, k_w1, k_b1, k_w2, k_b2, k_x2 = jax.random.split(key, 6)

    # Small shapes consistent with the module: Linear(10 -> 5) -> Linear(5 -> 1).
    B = 8
    x = jax.random.normal(k_x, (B, 10), dtype=jnp.float32)

    w1 = jax.random.normal(k_w1, (5, 10), dtype=jnp.float32) * 0.1
    b1 = jax.random.normal(k_b1, (5,), dtype=jnp.float32) * 0.1
    w2 = jax.random.normal(k_w2, (1, 5), dtype=jnp.float32) * 0.1
    b2 = jax.random.normal(k_b2, (1,), dtype=jnp.float32) * 0.1

    def reference(xv):
        # Layer-by-layer reference, identical to the PyTorch forward.
        return (xv @ w1.T + b1) @ w2.T + b2

    out = simple_model_forward(x, w1, b1, w2, b2)
    jax.block_until_ready(out)
    assert out.shape == (B, 1)
    assert jnp.allclose(out, reference(x), atol=1e-5, rtol=1e-5)

    # Exercise the multi-step batch grid and ragged-tail padding path (still small).
    B2 = 300
    x2 = jax.random.normal(k_x2, (B2, 10), dtype=jnp.float32)
    out2 = simple_model_forward(x2, w1, b1, w2, b2, tb=128)   # pad 300 -> 384, grid=(3,)
    jax.block_until_ready(out2)
    assert out2.shape == (B2, 1)
    assert jnp.allclose(out2, reference(x2), atol=1e-5, rtol=1e-5)

    print("KERNEL_OK")
</pallas_src>

<mosaic_0001>
module attributes {stable_mosaic.version = 11 : i64} {
  func.func @fused_affine_kernel(%arg0: i32, %arg1: memref<10x128xf32, #tpu.memory_space<vmem>>, %arg2: memref<10x1xf32, #tpu.memory_space<vmem>>, %arg3: memref<1x1xf32, #tpu.memory_space<smem>>, %arg4: memref<1x128xf32, #tpu.memory_space<vmem>>) attributes {dimension_semantics = [#tpu.dimension_semantics<parallel>], iteration_bounds = array<i64: 1>, scalar_prefetch = 0 : i64, scratch_operands = 0 : i64, tpu.core_type = #tpu.core_type<tc>, window_params = [{transform_indices = @transform_0, window_bounds = array<i64: 10, 128>}, {pipeline_mode = #tpu.pipeline_mode<synchronous>, transform_indices = @transform_1, window_bounds = array<i64: 10, 1>}, {transform_indices = @transform_2, window_bounds = array<i64: 1, 1>}, {transform_indices = @transform_3, window_bounds = array<i64: 1, 128>}]} {
    %c0 = arith.constant 0 : index
    %c0_0 = arith.constant 0 : index
    %0 = vector.load %arg1[%c0, %c0_0] : memref<10x128xf32, #tpu.memory_space<vmem>>, vector<10x128xf32>
    %c0_1 = arith.constant 0 : index
    %c0_2 = arith.constant 0 : index
    %1 = vector.load %arg2[%c0_1, %c0_2] : memref<10x1xf32, #tpu.memory_space<vmem>>, vector<10x1xf32>
    %2 = vector.broadcast %1 : vector<10x1xf32> to vector<10x128xf32>
    %3 = arith.mulf %0, %2 : vector<10x128xf32>
    %cst = arith.constant dense<0.000000e+00> : vector<128xf32>
    %4 = vector.multi_reduction <add>, %3, %cst [0] : vector<10x128xf32> to vector<128xf32>
    %5 = vector.shape_cast %4 : vector<128xf32> to vector<1x128xf32>
    %c0_3 = arith.constant 0 : index
    %c0_4 = arith.constant 0 : index
    %6 = memref.load %arg3[%c0_3, %c0_4] : memref<1x1xf32, #tpu.memory_space<smem>>
    %7 = vector.broadcast %6 : f32 to vector<1x128xf32>
    %8 = arith.addf %5, %7 : vector<1x128xf32>
    %c0_5 = arith.constant 0 : index
    %c0_6 = arith.constant 0 : index
    %9 = vector.load %arg4[%c0_5, %c0_6] : memref<1x128xf32, #tpu.memory_space<vmem>>, vector<1x128xf32>
    tpu.vector_store %arg4[%c0_5, %c0_6], %8 {strides = array<i32>} : memref<1x128xf32, #tpu.memory_space<vmem>>, vector<1x128xf32>,
    return
  }
  func.func @transform_0(%arg0: i32) -> (i32, i32) {
    %c0_i32 = arith.constant 0 : i32
    %c0_i32_0 = arith.constant 0 : i32
    return %c0_i32, %arg0 : i32, i32
  }
  func.func @transform_1(%arg0: i32) -> (i32, i32) {
    %c0_i32 = arith.constant 0 : i32
    %c0_i32_0 = arith.constant 0 : i32
    %c0_i32_1 = arith.constant 0 : i32
    return %c0_i32, %c0_i32_0 : i32, i32
  }
  func.func @transform_2(%arg0: i32) -> (i32, i32) {
    %c0_i32 = arith.constant 0 : i32
    %c0_i32_0 = arith.constant 0 : i32
    %c0_i32_1 = arith.constant 0 : i32
    return %c0_i32, %c0_i32_0 : i32, i32
  }
  func.func @transform_3(%arg0: i32) -> (i32, i32) {
    %c0_i32 = arith.constant 0 : i32
    %c0_i32_0 = arith.constant 0 : i32
    return %c0_i32, %arg0 : i32, i32
  }
}

</mosaic_0001>

<llo_original>
// kernel: tpu_custom_call.1
$region0: #{tpu_custom_call.1}
  #allocation0 [shape = 'u32[]', space=smem, size = 0x4, offset = 0x4, fixed_abs, tag = 'smem constant byte address 0x4 - core index']
  #allocation1 [shape = 'u32[144,128]{1,0:T(1,128)}', space=vmem, size = 0x12000, scoped, tag = 'internal scratch']
  #allocation2 [shape = 'f32[1,1]{1,0:T(1,128)S(6)}', space=smem, size = 0x200, scoped, tag = 'scoped memory for tpu_custom_call.1']
  %s0 = inlined_call_operand.vmem [shape: f32[10,128], index: 0, kind: input, shape index: {}]
  %s1 = inlined_call_operand.vmem [shape: f32[10,1], index: 1, kind: input, shape index: {}]
  %s2 = inlined_call_operand.<no memory space> [shape: f32[1,1], index: 2, kind: input, shape index: {}]
  %s3 = inlined_call_operand.hbm [shape: f32[1,128], index: 3, kind: output, shape index: {}]
  %s4 = sld [smem:[#allocation0]]
  $region22: #{tpu_custom_call.1} parent=0
    _
  %s6 = ssub.s32 1, %s4
  %s7 = scalar_select 0, %s6, %s4
  %8 = sst [smem:[#allocation2]] %s2
  $region1: #{tpu_custom_call.1} parent=0
    #allocation3 [shape = 'u8[512]{0}', space=vmem, size = 0x400, scoped, tag = 'output window, operand 0, single buffered']
    #allocation4 [shape = 's32[1]{0}', space=sflag, size = 0x4, scoped, tag = 'scoped memory for tpu_custom_call.1']
    %9 = vsyncpa [#allocation4], 0
    // Predicated region
    $region2: #{tpu_custom_call.1} parent=1 // pred_check
      _
    $region3: #{tpu_custom_call.1} parent=1 // pred_check_branch
      %11 = sbr.rel (0) target = $region5
    $region4: #{tpu_custom_call.1} parent=1 // pred_region
      _
    $region5: #{tpu_custom_call.1} parent=1 // pred_fallthru
      _
    // Predicated region
    $region6: #{tpu_custom_call.1} parent=1 // pred_check
      _
    $region7: #{tpu_custom_call.1} parent=1 // pred_check_branch
      %13 = sbr.rel (0) target = $region9
    $region8: #{tpu_custom_call.1} parent=1 // pred_region
      _
    $region9: #{tpu_custom_call.1} parent=1 // pred_fallthru
      _
    // Predicated region
    $region10: #{tpu_custom_call.1} parent=1 // pred_check
      _
    $region11: #{tpu_custom_call.1} parent=1 // pred_check_branch
      %15 = sbr.rel (0) target = $region13
    $region12: #{tpu_custom_call.1} parent=1 // pred_region
      _
    $region13: #{tpu_custom_call.1} parent=1 // pred_fallthru
      _
    %v16 = vld [vmem:[%s0] sm:$0xff]
    %v17 = vld [vmem:[%s0 + $0x8] sm:$0x3]
    %v18 = vld [vmem:[%s1] sm:$0xff]
    %v19 = vld [vmem:[%s1 + $0x8] sm:$0x3]
    %21 = vset.pattern.permute.xlu0 0
    %22 = vperm.xlu0 %21, %v18
    %v23 = vpop.permute.xlu0 %22
    %26 = vset.pattern.permute.xlu0 0
    %27 = vperm.xlu0 %26, %v19
    %v28 = vpop.permute.xlu0 %27
    %v30 = vmul.f32 %v16, %v23
    %v31 = vmul.f32 %v17, %v28
    %vm32 = vcmask 1041408
    %v33 = vsel %vm32, %v31, 0.0
    %v34 = vadd.f32 %v30, %v33
    %v35 = vrot.slane %v34, 4
    %v36 = vadd.f32 %v34, %v35
    %v37 = vrot.slane %v36, 2
    %v38 = vadd.f32 %v36, %v37
    %v39 = vrot.slane %v38, 1
    %v40 = vadd.f32 %v38, %v39
    %s41 = sld [smem:[#allocation2]]
    %v42 = vstv %s41
    %v43 = vadd.f32 %v40, %v42
    %44 = vst [vmem:[#allocation3] sm:$0x1] %v43
    // Predicated region
    $region14: #{tpu_custom_call.1} parent=1 // pred_check
      _
    $region15: #{tpu_custom_call.1} parent=1 // pred_check_branch
      %46 = sbr.rel (0) target = $region17
    $region16: #{tpu_custom_call.1} parent=1 // pred_region
      %s48 = ssub.s32 16, 16
      %49 = vsyncadd [#allocation4], %s48
      %s51 = sshll.u32 [#allocation3], 4
      %s52 = int_to_ptr.vmem [resolvable:$true] %s51
      %54 = dma.vmem_to_hbm [thread:$0]  %s52, 16, %s3, [#allocation4]
    $region17: #{tpu_custom_call.1} parent=1 // pred_fallthru
      _
    // Predicated region
    $region18: #{tpu_custom_call.1} parent=1 // pred_check
      _
    $region19: #{tpu_custom_call.1} parent=1 // pred_check_branch
      %56 = sbr.rel (0) target = $region21
    $region20: #{tpu_custom_call.1} parent=1 // pred_region
      %57 = dma.done [#allocation4], 16
    $region21: #{tpu_custom_call.1} parent=1 // pred_fallthru
      _
    %58 = vsyncpa [#allocation4], 1

</llo_original>
